<compile_context>
chip_gen: v6e
topology: v6e:2x2x1
jax: 0.10.0
libtpu: 0.0.40
codegen_flags: <defaults>
</compile_context>

<pallas_src>
import jax
import jax.numpy as jnp
from jax.experimental import pallas as pl
from jax.experimental.pallas import tpu as pltpu

_X_BLOCK_TARGET_BYTES = 4 * 1024 * 1024   # ~4 MiB of x per grid step
_VMEM_LIMIT_BYTES = 32 * 1024 * 1024      # safe scoped limit on v5e/v6e/v7x


def _element_scale_kernel(x_ref, s_ref, o_ref):
    # Multiply in the promoted dtype (f32 scale); cast only on store.
    o_ref[...] = (x_ref[...] * s_ref[...]).astype(o_ref.dtype)


def _cdiv(a, b):
    return -(-a // b)


def _round_up(a, b):
    return _cdiv(a, b) * b


def _choose_tiles(R, L, x_itemsize):
    """(row_tile, lane_tile, n_row_blocks, n_lane_blocks) for a (R, L) view."""
    sublane = {4: 8, 2: 16, 1: 32}.get(x_itemsize, 8)
    target_elems = max(_X_BLOCK_TARGET_BYTES // x_itemsize, sublane * 128)

    # Lane (last) dim: full extent if a sublane-high strip fits the budget
    # (full extent is always layout-legal), otherwise an even 128-aligned split.
    if L * sublane <= target_elems:
        tl, n_l = L, 1
    else:
        tl_cap = max(((target_elems // sublane) // 128) * 128, 128)
        n_l = _cdiv(L, tl_cap)
        tl = _round_up(_cdiv(L, n_l), 128)
        n_l = _cdiv(L, tl)

    # Row (second-to-last) dim: fill the remaining byte budget, split evenly,
    # and keep >= 2 grid steps when there is enough data (v7x has 2 TCs).
    tr_cap = max(((target_elems // tl) // sublane) * sublane, sublane)
    n_r = _cdiv(R, tr_cap)
    if n_r == 1 and n_l == 1 and R >= 2 * sublane:
        n_r = 2
    if n_r == 1:
        tr = R                      # full extent: always layout-legal
    else:
        tr = _round_up(_cdiv(R, n_r), sublane)
        n_r = _cdiv(R, tr)
    return tr, tl, n_r, n_l


def element_scale(x: jax.Array, scale: jax.Array, *, donate_x: bool = False) -> jax.Array:
    """x: (N, C, H, W), scale: (1, C, 1, 1)  ->  x * scale."""
    N, C, H, W = x.shape
    assert scale.shape == (1, C, 1, 1)
    hw = H * W
    x_itemsize = jnp.dtype(x.dtype).itemsize
    out_dtype = jnp.result_type(x.dtype, scale.dtype)   # mirrors PyTorch promotion

    scale_c = scale.reshape(C)

    # Pick a 2-D view whose last (lane) dim is wide and dense.
    row_scale_mode = hw >= 128 and (hw % 128 == 0 or hw >= 512)
    if row_scale_mode:
        # (N*C, hw): per-row scale (tiny, loop-invariant).
        R, L = N * C, hw
        x2 = x.reshape(R, L)
        s2 = jnp.tile(scale_c, N).reshape(R, 1)
    else:
        # Small / ragged feature maps: (N, C*hw) with a per-lane repeated
        # scale so the output stays lane-dense (>=128 wide).
        R, L = N, C * hw
        x2 = x.reshape(R, L)
        s2 = jnp.repeat(scale_c, hw).reshape(1, L)

    tr, tl, n_r, n_l = _choose_tiles(R, L, x_itemsize)

    if row_scale_mode:
        # Rows outer: the row-indexed scale block is only re-fetched when the
        # row block changes.
        grid = (n_r, n_l)
        x_map = lambda r, l: (r, l)
        s_spec = pl.BlockSpec((tr, 1), lambda r, l: (r, 0))
    else:
        # Lanes outer: the lane-indexed scale block is only re-fetched when
        # the lane block changes.
        grid = (n_l, n_r)
        x_map = lambda l, r: (r, l)
        s_spec = pl.BlockSpec((1, tl), lambda l, r: (0, l))

    io_aliases = {}
    if donate_x and out_dtype == x.dtype:
        io_aliases = {0: 0}   # x2 is input 0; same shape & dtype as the output

    out = pl.pallas_call(
        _element_scale_kernel,
        out_shape=jax.ShapeDtypeStruct((R, L), out_dtype),
        grid=grid,
        in_specs=[pl.BlockSpec((tr, tl), x_map), s_spec],
        out_specs=pl.BlockSpec((tr, tl), x_map),
        input_output_aliases=io_aliases,
        compiler_params=pltpu.CompilerParams(
            dimension_semantics=("parallel", "parallel"),
            vmem_limit_bytes=_VMEM_LIMIT_BYTES,
        ),
    )(x2, s2)

    return out.reshape(N, C, H, W)


class ElementScale:
    """JAX mirror of the PyTorch ElementScale module."""

    def __init__(self, embed_dims: int, init_value: float = 0.0):
        # scale = init_value * ones((1, embed_dims, 1, 1)), same as PyTorch.
        self.scale = init_value * jnp.ones((1, embed_dims, 1, 1), dtype=jnp.float32)

    def __call__(self, x: jax.Array) -> jax.Array:
        return element_scale(x, self.scale)


if __name__ == "__main__":
    key = jax.random.PRNGKey(0)

    # 1) Primary small test (matches the module's expected NCHW usage).
    #    hw = 256 is 128-aligned -> (N*C, hw) per-row-scale path.
    N, C, H, W = 2, 4, 16, 16
    x = jax.random.normal(key, (N, C, H, W), dtype=jnp.float32)
    mod = ElementScale(embed_dims=C, init_value=0.5)
    out = jax.block_until_ready(mod(x))
    ref = x * mod.scale
    assert out.shape == (N, C, H, W)
    assert jnp.allclose(out, ref, atol=1e-6, rtol=1e-6)

    # 2) Ragged small feature map -> (N, C*hw) lane-dense per-lane-scale path.
    k2 = jax.random.PRNGKey(1)
    N2, C2, H2, W2 = 2, 40, 20, 20
    x2 = jax.random.normal(k2, (N2, C2, H2, W2), dtype=jnp.float32)
    mod2 = ElementScale(embed_dims=C2, init_value=-1.25)
    out2 = jax.block_until_ready(mod2(x2))
    assert jnp.allclose(out2, x2 * mod2.scale, atol=1e-6, rtol=1e-6)

    # 3) Moderate shape that exercises the multi-step row-tiled grid.
    k3 = jax.random.PRNGKey(2)
    N3, C3, H3, W3 = 4, 16, 24, 24
    x3 = jax.random.normal(k3, (N3, C3, H3, W3), dtype=jnp.float32)
    mod3 = ElementScale(embed_dims=C3, init_value=2.0)
    out3 = jax.block_until_ready(mod3(x3))
    assert jnp.allclose(out3, x3 * mod3.scale, atol=1e-6, rtol=1e-6)

    print("KERNEL_OK")
</pallas_src>

<mosaic_0001>
module attributes {stable_mosaic.version = 11 : i64} {
  func.func @_element_scale_kernel(%arg0: i32, %arg1: i32, %arg2: memref<8x256xf32, #tpu.memory_space<vmem>>, %arg3: memref<8x1xf32, #tpu.memory_space<vmem>>, %arg4: memref<8x256xf32, #tpu.memory_space<vmem>>) attributes {dimension_semantics = [#tpu.dimension_semantics<parallel>, #tpu.dimension_semantics<parallel>], iteration_bounds = array<i64: 1, 1>, scalar_prefetch = 0 : i64, scratch_operands = 0 : i64, tpu.core_type = #tpu.core_type<tc>, window_params = [{transform_indices = @transform_0, window_bounds = array<i64: 8, 256>}, {transform_indices = @transform_1, window_bounds = array<i64: 8, 1>}, {transform_indices = @transform_2, window_bounds = array<i64: 8, 256>}]} {
    %c0 = arith.constant 0 : index
    %c0_0 = arith.constant 0 : index
    %0 = vector.load %arg2[%c0, %c0_0] : memref<8x256xf32, #tpu.memory_space<vmem>>, vector<8x256xf32>
    %c0_1 = arith.constant 0 : index
    %c0_2 = arith.constant 0 : index
    %1 = vector.load %arg3[%c0_1, %c0_2] : memref<8x1xf32, #tpu.memory_space<vmem>>, vector<8x1xf32>
    %2 = vector.broadcast %1 : vector<8x1xf32> to vector<8x256xf32>
    %3 = arith.mulf %0, %2 : vector<8x256xf32>
    %c0_3 = arith.constant 0 : index
    %c0_4 = arith.constant 0 : index
    %4 = vector.load %arg4[%c0_3, %c0_4] : memref<8x256xf32, #tpu.memory_space<vmem>>, vector<8x256xf32>
    tpu.vector_store %arg4[%c0_3, %c0_4], %3 {strides = array<i32>} : memref<8x256xf32, #tpu.memory_space<vmem>>, vector<8x256xf32>,
    return
  }
  func.func @transform_0(%arg0: i32, %arg1: i32) -> (i32, i32) {
    %c0_i32 = arith.constant 0 : i32
    return %arg0, %arg1 : i32, i32
  }
  func.func @transform_1(%arg0: i32, %arg1: i32) -> (i32, i32) {
    %c0_i32 = arith.constant 0 : i32
    %c0_i32_0 = arith.constant 0 : i32
    return %arg0, %c0_i32 : i32, i32
  }
  func.func @transform_2(%arg0: i32, %arg1: i32) -> (i32, i32) {
    %c0_i32 = arith.constant 0 : i32
    return %arg0, %arg1 : i32, i32
  }
}

</mosaic_0001>

<llo_original>
// kernel: tpu_custom_call.1
$region0: #{tpu_custom_call.1}
  #allocation0 [shape = 'u32[]', space=smem, size = 0x4, offset = 0x4, fixed_abs, tag = 'smem constant byte address 0x4 - core index']
  #allocation1 [shape = 'u32[144,128]{1,0:T(1,128)}', space=vmem, size = 0x12000, scoped, tag = 'internal scratch']
  %s0 = inlined_call_operand.hbm [shape: f32[8,256], index: 0, kind: input, shape index: {}]
  %s1 = inlined_call_operand.vmem [shape: f32[8,1], index: 1, kind: input, shape index: {}]
  %s2 = inlined_call_operand.hbm [shape: f32[8,256], index: 2, kind: output, shape index: {}]
  %s3 = sld [smem:[#allocation0]]
  $region22: #{tpu_custom_call.1} parent=0
    _
  %s5 = ssub.s32 1, %s3
  %s6 = scalar_select 0, %s5, %s3
  $region1: #{tpu_custom_call.1} parent=0
    #allocation2 [shape = 'u8[8192]{0}', space=vmem, size = 0x2000, scoped, tag = 'input window, operand 0, single buffered']
    #allocation3 [shape = 's32[1]{0}', space=sflag, size = 0x4, scoped, tag = 'scoped memory for tpu_custom_call.1']
    #allocation4 [shape = 's32[1]{0}', space=sflag, size = 0x4, scoped, tag = 'scoped memory for tpu_custom_call.1']
    #allocation5 [shape = 'u8[8192]{0}', space=vmem, size = 0x2000, scoped, tag = 'output window, operand 0, single buffered']
    %7 = vsyncpa [#allocation3], 0
    %8 = vsyncpa [#allocation4], 0
    // Predicated region
    $region2: #{tpu_custom_call.1} parent=1 // pred_check
      _
    $region3: #{tpu_custom_call.1} parent=1 // pred_check_branch
      %10 = sbr.rel (0) target = $region5
    $region4: #{tpu_custom_call.1} parent=1 // pred_region
      %s12 = ssub.s32 256, 256
      %13 = vsyncadd [#allocation3], %s12
      %s15 = sshll.u32 [#allocation2], 4
      %s16 = int_to_ptr.vmem [resolvable:$true] %s15
      %18 = dma.hbm_to_vmem [thread:$0]  %s0, 256, %s16, [#allocation3]
    $region5: #{tpu_custom_call.1} parent=1 // pred_fallthru
      _
    // Predicated region
    $region6: #{tpu_custom_call.1} parent=1 // pred_check
      _
    $region7: #{tpu_custom_call.1} parent=1 // pred_check_branch
      %20 = sbr.rel (0) target = $region9
    $region8: #{tpu_custom_call.1} parent=1 // pred_region
      _
    $region9: #{tpu_custom_call.1} parent=1 // pred_fallthru
      _
    // Predicated region
    $region10: #{tpu_custom_call.1} parent=1 // pred_check
      _
    $region11: #{tpu_custom_call.1} parent=1 // pred_check_branch
      %22 = sbr.rel (0) target = $region13
    $region12: #{tpu_custom_call.1} parent=1 // pred_region
      %23 = dma.done [#allocation3], 256
    $region13: #{tpu_custom_call.1} parent=1 // pred_fallthru
      _
    %v24 = vld [vmem:[#allocation2] sm:$0xff]
    %v25 = vld [vmem:[#allocation2 + $0x8] sm:$0xff]
    %v26 = vld [vmem:[%s1] sm:$0xff]
    %28 = vset.pattern.permute.xlu0 0
    %29 = vperm.xlu0 %28, %v26
    %v30 = vpop.permute.xlu0 %29
    %v32 = vmul.f32 %v24, %v30
    %v33 = vmul.f32 %v25, %v30
    %34 = vst [vmem:[#allocation5] sm:$0xff] %v32
    %35 = vst [vmem:[#allocation5 + $0x8] sm:$0xff] %v33
    // Predicated region
    $region14: #{tpu_custom_call.1} parent=1 // pred_check
      _
    $region15: #{tpu_custom_call.1} parent=1 // pred_check_branch
      %37 = sbr.rel (0) target = $region17
    $region16: #{tpu_custom_call.1} parent=1 // pred_region
      %s39 = ssub.s32 256, 256
      %40 = vsyncadd [#allocation4], %s39
      %s42 = sshll.u32 [#allocation5], 4
      %s43 = int_to_ptr.vmem [resolvable:$true] %s42
      %45 = dma.vmem_to_hbm [thread:$0]  %s43, 256, %s2, [#allocation4]
    $region17: #{tpu_custom_call.1} parent=1 // pred_fallthru
      _
    // Predicated region
    $region18: #{tpu_custom_call.1} parent=1 // pred_check
      _
    $region19: #{tpu_custom_call.1} parent=1 // pred_check_branch
      %47 = sbr.rel (0) target = $region21
    $region20: #{tpu_custom_call.1} parent=1 // pred_region
      %48 = dma.done [#allocation4], 256
    $region21: #{tpu_custom_call.1} parent=1 // pred_fallthru
      _
    %49 = vsyncpa [#allocation3], 1
    %50 = vsyncpa [#allocation4], 1

</llo_original>
